<compile_context>
chip_gen: v6e
topology: v6e:2x2x1
jax: 0.10.0
libtpu: 0.0.40
codegen_flags: <defaults>
</compile_context>

<pallas_src>
import functools

import jax
import jax.numpy as jnp
from jax.experimental import pallas as pl
from jax.experimental.pallas import tpu as pltpu

EPS = 1e-5
LANE = 128


def _round_up(n, m):
    return (n + m - 1) // m * m


def _accum_partials(z, sum_acc, sq_acc):
    """Accumulate per-tile (sum, sum_sq) partials with VPU adds only.

    z is (tile_n, C) with tile_n a multiple of 8; folding to (tile_n//8, 8, C)
    and summing over the leading axis is pure elementwise work, so no
    cross-sublane reduce happens per tile (only once, at finalize).
    """
    g = z.shape[0] // 8
    zz = z.reshape(g, 8, z.shape[1])
    sum_acc[...] += jnp.sum(zz, axis=0)
    sq_acc[...] += jnp.sum(zz * zz, axis=0)


def _scale_shift(stats, gamma, beta, inv_n):
    """Raw (sum, sum_sq) stats -> BN scale/shift (training mode)."""
    mu = stats[0:1, :] * inv_n
    var = jnp.maximum(stats[1:2, :] * inv_n - mu * mu, 0.0)  # guard cancellation
    scale = gamma * jax.lax.rsqrt(var + EPS)                  # rsqrt -> EUP slot
    shift = beta - mu * scale
    return scale, shift


# ----------------------------------------------------------------------------
# Stage 1: z1 | zs = x @ [w1 | ws]  (fused first matmul), accumulate stats.
# ----------------------------------------------------------------------------
def _stage1_kernel(x_ref, w_ref, z1_ref, zs_ref, s1_ref, ss_ref,
                   sum_acc, sq_acc, *, chid_p, mxu_dtype):
    i = pl.program_id(0)

    @pl.when(i == 0)
    def _():
        sum_acc[...] = jnp.zeros_like(sum_acc)
        sq_acc[...] = jnp.zeros_like(sq_acc)

    x = x_ref[...].astype(mxu_dtype)  # cast to MXU dtype in-kernel (VPU, under MXU)
    z = jnp.dot(x, w_ref[...], preferred_element_type=jnp.float32)
    z1_ref[...] = z[:, :chid_p]
    zs_ref[...] = z[:, chid_p:]
    _accum_partials(z, sum_acc, sq_acc)

    @pl.when(i == pl.num_programs(0) - 1)
    def _():
        sa = sum_acc[...]
        qa = sq_acc[...]
        s1_ref[...] = jnp.concatenate(
            [jnp.sum(sa[:, :chid_p], axis=0, keepdims=True),
             jnp.sum(qa[:, :chid_p], axis=0, keepdims=True)], axis=0)
        ss_ref[...] = jnp.concatenate(
            [jnp.sum(sa[:, chid_p:], axis=0, keepdims=True),
             jnp.sum(qa[:, chid_p:], axis=0, keepdims=True)], axis=0)


# ----------------------------------------------------------------------------
# Stages 2/3: h = relu(bn(z_in)); z_out = h @ W; accumulate stats over z_out.
# ----------------------------------------------------------------------------
def _bn_relu_matmul_kernel(zin_ref, stats_ref, bnp_ref, w_ref, zout_ref, sout_ref,
                           sum_acc, sq_acc, *, inv_n, mxu_dtype, tile_n, n_valid,
                           mask_rows):
    i = pl.program_id(0)

    @pl.when(i == 0)
    def _():
        sum_acc[...] = jnp.zeros_like(sum_acc)
        sq_acc[...] = jnp.zeros_like(sq_acc)

    bnp = bnp_ref[...]
    scale, shift = _scale_shift(stats_ref[...], bnp[0:1, :], bnp[1:2, :], inv_n)
    h = jnp.maximum(zin_ref[...] * scale + shift, 0.0)
    if mask_rows:
        # Keep padded batch rows out of the next layer's batch statistics.
        row = i * tile_n + jax.lax.broadcasted_iota(jnp.int32, h.shape, 0)
        h = jnp.where(row < n_valid, h, 0.0)

    zout = jnp.dot(h.astype(mxu_dtype), w_ref[...], preferred_element_type=jnp.float32)
    zout_ref[...] = zout
    _accum_partials(zout, sum_acc, sq_acc)

    @pl.when(i == pl.num_programs(0) - 1)
    def _():
        sout_ref[...] = jnp.concatenate(
            [jnp.sum(sum_acc[...], axis=0, keepdims=True),
             jnp.sum(sq_acc[...], axis=0, keepdims=True)], axis=0)


# ----------------------------------------------------------------------------
# Stage 4: out = relu(bn3(z3) + bns(zs)).  No cross-tile state -> parallel.
# ----------------------------------------------------------------------------
def _bn_add_relu_kernel(z3_ref, s3_ref, zs_ref, ss_ref, bnp_ref, o_ref, *, inv_n):
    bnp = bnp_ref[...]
    sc3, sh3 = _scale_shift(s3_ref[...], bnp[0:1, :], bnp[1:2, :], inv_n)
    scs, shs = _scale_shift(ss_ref[...], bnp[2:3, :], bnp[3:4, :], inv_n)
    o_ref[...] = jnp.maximum(z3_ref[...] * sc3 + sh3 + zs_ref[...] * scs + shs, 0.0)


# ----------------------------------------------------------------------------
# One-time parameter preparation (hoisted out of the forward pass).
# ----------------------------------------------------------------------------
def prepare_params(params, compute_dtype=jnp.bfloat16):
    """Pad / concatenate / cast weights once; pack BN gammas+betas per stage.

    Linear biases in `params` are intentionally ignored: training-mode
    BatchNorm cancels them exactly.
    """
    w1, w2, w3, ws = params["w1"], params["w2"], params["w3"], params["ws"]
    c_in, c_hid = w1.shape
    c_exp = w3.shape[1]
    cin_p, chid_p, cexp_p = (_round_up(c, LANE) for c in (c_in, c_hid, c_exp))

    def pad2(a, rows, cols):
        return jnp.pad(a, ((0, rows - a.shape[0]), (0, cols - a.shape[1])))

    w1s = jnp.concatenate([pad2(w1, cin_p, chid_p), pad2(ws, cin_p, cexp_p)],
                          axis=1).astype(compute_dtype)           # (cin_p, chid_p+cexp_p)
    w2p = pad2(w2, chid_p, chid_p).astype(compute_dtype)
    w3p = pad2(w3, chid_p, cexp_p).astype(compute_dtype)

    bnp1 = jnp.concatenate([pad2(params["g1"], 1, chid_p),
                            pad2(params["be1"], 1, chid_p)], axis=0)       # (2, chid_p)
    bnp2 = jnp.concatenate([pad2(params["g2"], 1, chid_p),
                            pad2(params["be2"], 1, chid_p)], axis=0)       # (2, chid_p)
    bnp_out = jnp.concatenate([pad2(params["g3"], 1, cexp_p),
                               pad2(params["be3"], 1, cexp_p),
                               pad2(params["gs"], 1, cexp_p),
                               pad2(params["bes"], 1, cexp_p)], axis=0)    # (4, cexp_p)

    return dict(w1s=w1s, w2=w2p, w3=w3p, bnp1=bnp1, bnp2=bnp2, bnp_out=bnp_out,
                dims=(c_in, c_hid, c_exp, cin_p, chid_p, cexp_p))


def _choose_tile_n(n_rows, cin_p, chid_p, cexp_p, budget_bytes=8 << 20):
    # Size the batch tile against the largest per-tile live set (stage 1:
    # x tile + z1 + zs tiles, f32, double-buffered) so it fits comfortably in
    # v7x's 64 MiB physical / 32 MiB scoped VMEM as well as v5e/v6e.
    per_row = 4 * 2 * (cin_p + chid_p + cexp_p)
    t = max(8, min(512, (budget_bytes // per_row) // 8 * 8))
    return int(min(t, _round_up(n_rows, 8)))


# ----------------------------------------------------------------------------
# Forward pass: 4 batch-tiled pallas_calls (two-pass BN per layer).
# ----------------------------------------------------------------------------
def bottleneck_forward(x, prepped, *, tile_n=None):
    c_in, c_hid, c_exp, cin_p, chid_p, cexp_p = prepped["dims"]
    N = x.shape[0]
    assert x.shape[1] == c_in
    mxu_dtype = prepped["w1s"].dtype
    W = chid_p + cexp_p
    f32 = jnp.float32

    if tile_n is None:
        tile_n = _choose_tile_n(N, cin_p, chid_p, cexp_p)
    tile_n = max(8, (tile_n // 8) * 8)
    n_pad = _round_up(N, tile_n)
    num_tiles = n_pad // tile_n
    mask_rows = n_pad != N
    inv_n = 1.0 / N          # real batch size: zero-padded rows never reach the stats

    # Activation stays f32 on the way in; the kernels cast to the MXU dtype.
    x_p = jnp.pad(x, ((0, n_pad - N), (0, cin_p - c_in)))

    # VMEM budget derived from the actual per-tile footprint (stage 1 is largest).
    mxu_is = jnp.dtype(mxu_dtype).itemsize
    blk = (tile_n * cin_p * 4            # x tile
           + cin_p * W * mxu_is          # resident fused weight
           + tile_n * W * 4              # z1 + zs tiles
           + chid_p * (chid_p + cexp_p) * mxu_is   # w2 / w3 (later stages)
           + (2 + 16) * W * 4)           # stats output + (8,C) scratch x2
    vmem_bytes = int(min(48 << 20, max(8 << 20, 2 * blk + (4 << 20))))

    serial = pltpu.CompilerParams(dimension_semantics=("arbitrary",),
                                  vmem_limit_bytes=vmem_bytes)
    parallel = pltpu.CompilerParams(dimension_semantics=("parallel",),
                                    vmem_limit_bytes=vmem_bytes)

    row = lambda cols: pl.BlockSpec((tile_n, cols), lambda i: (i, 0))
    const = lambda shape: pl.BlockSpec(shape, lambda i: tuple(0 for _ in shape))

    # --- Stage 1: fused residual-Linear1 + shortcut projection, stats over z ---
    z1, zs, stats1, statss = pl.pallas_call(
        functools.partial(_stage1_kernel, chid_p=chid_p, mxu_dtype=mxu_dtype),
        grid=(num_tiles,),
        in_specs=[row(cin_p), const((cin_p, W))],
        out_shape=(jax.ShapeDtypeStruct((n_pad, chid_p), f32),
                   jax.ShapeDtypeStruct((n_pad, cexp_p), f32),
                   jax.ShapeDtypeStruct((2, chid_p), f32),
                   jax.ShapeDtypeStruct((2, cexp_p), f32)),
        out_specs=(row(chid_p), row(cexp_p), const((2, chid_p)), const((2, cexp_p))),
        scratch_shapes=[pltpu.VMEM((8, W), f32), pltpu.VMEM((8, W), f32)],
        compiler_params=serial,
    )(x_p, prepped["w1s"])

    bn_mm = functools.partial(_bn_relu_matmul_kernel, inv_n=inv_n, mxu_dtype=mxu_dtype,
                              tile_n=tile_n, n_valid=N, mask_rows=mask_rows)

    # --- Stage 2: BN1 -> ReLU -> Linear2, stats over z2 ---
    z2, stats2 = pl.pallas_call(
        bn_mm,
        grid=(num_tiles,),
        in_specs=[row(chid_p), const((2, chid_p)), const((2, chid_p)),
                  const((chid_p, chid_p))],
        out_shape=(jax.ShapeDtypeStruct((n_pad, chid_p), f32),
                   jax.ShapeDtypeStruct((2, chid_p), f32)),
        out_specs=(row(chid_p), const((2, chid_p))),
        scratch_shapes=[pltpu.VMEM((8, chid_p), f32), pltpu.VMEM((8, chid_p), f32)],
        compiler_params=serial,
    )(z1, stats1, prepped["bnp1"], prepped["w2"])

    # --- Stage 3: BN2 -> ReLU -> Linear3, stats over z3 ---
    z3, stats3 = pl.pallas_call(
        bn_mm,
        grid=(num_tiles,),
        in_specs=[row(chid_p), const((2, chid_p)), const((2, chid_p)),
                  const((chid_p, cexp_p))],
        out_shape=(jax.ShapeDtypeStruct((n_pad, cexp_p), f32),
                   jax.ShapeDtypeStruct((2, cexp_p), f32)),
        out_specs=(row(cexp_p), const((2, cexp_p))),
        scratch_shapes=[pltpu.VMEM((8, cexp_p), f32), pltpu.VMEM((8, cexp_p), f32)],
        compiler_params=serial,
    )(z2, stats2, prepped["bnp2"], prepped["w3"])

    # --- Stage 4: BN3(z3) + BNs(zs) -> ReLU (batch-parallel, megacore-friendly) ---
    out_p = pl.pallas_call(
        functools.partial(_bn_add_relu_kernel, inv_n=inv_n),
        grid=(num_tiles,),
        in_specs=[row(cexp_p), const((2, cexp_p)), row(cexp_p), const((2, cexp_p)),
                  const((4, cexp_p))],
        out_shape=jax.ShapeDtypeStruct((n_pad, cexp_p), f32),
        out_specs=row(cexp_p),
        compiler_params=parallel,
    )(z3, stats3, zs, statss, prepped["bnp_out"])

    return out_p[:N, :c_exp]


# ----------------------------------------------------------------------------
# Synthetic params + pure-JAX reference (PyTorch forward, training-mode BN).
# ----------------------------------------------------------------------------
def make_params(key, in_channels, out_channels, expansion=4):
    c_exp = out_channels * expansion
    keys = jax.random.split(key, 8)

    def lin(k, cin, cout):
        bound = 1.0 / jnp.sqrt(cin)
        kw, kb = jax.random.split(k)
        w = jax.random.uniform(kw, (cin, cout), jnp.float32, -bound, bound)
        b = jax.random.uniform(kb, (1, cout), jnp.float32, -bound, bound)
        return w, b

    w1, b1 = lin(keys[0], in_channels, out_channels)
    w2, b2 = lin(keys[1], out_channels, out_channels)
    w3, b3 = lin(keys[2], out_channels, c_exp)
    ws, bs = lin(keys[3], in_channels, c_exp)

    def bn_params(k, c):
        kg, kb = jax.random.split(k)
        g = 1.0 + 0.1 * jax.random.normal(kg, (1, c), jnp.float32)
        b = 0.1 * jax.random.normal(kb, (1, c), jnp.float32)
        return g, b

    g1, be1 = bn_params(keys[4], out_channels)
    g2, be2 = bn_params(keys[5], out_channels)
    g3, be3 = bn_params(keys[6], c_exp)
    gs, bes = bn_params(keys[7], c_exp)

    return dict(w1=w1, b1=b1, g1=g1, be1=be1,
                w2=w2, b2=b2, g2=g2, be2=be2,
                w3=w3, b3=b3, g3=g3, be3=be3,
                ws=ws, bs=bs, gs=gs, bes=bes)


def reference_forward(x, p):
    """Mirrors the PyTorch forward (training-mode BN, biases included)."""
    def bn(z, g, b):
        mu = jnp.mean(z, axis=0, keepdims=True)
        var = jnp.mean((z - mu) ** 2, axis=0, keepdims=True)
        return (z - mu) / jnp.sqrt(var + EPS) * g + b

    h = jnp.maximum(bn(x @ p["w1"] + p["b1"], p["g1"], p["be1"]), 0.0)
    h = jnp.maximum(bn(h @ p["w2"] + p["b2"], p["g2"], p["be2"]), 0.0)
    h = bn(h @ p["w3"] + p["b3"], p["g3"], p["be3"])
    s = bn(x @ p["ws"] + p["bs"], p["gs"], p["bes"])
    return jnp.maximum(h + s, 0.0)


if __name__ == "__main__":
    key = jax.random.PRNGKey(0)
    kx, kp, kx2 = jax.random.split(key, 3)

    in_channels, out_channels = 16, 8   # expanded output = 32 (projection shortcut)
    params = make_params(kp, in_channels, out_channels)

    prepped_bf16 = prepare_params(params)                       # default: bf16 MXU operands
    prepped_f32 = prepare_params(params, compute_dtype=jnp.float32)

    # --- Case 1: small batch, single tile ---
    N = 8
    x = jax.random.normal(kx, (N, in_channels), jnp.float32)
    ref = reference_forward(x, params)

    out = jax.block_until_ready(bottleneck_forward(x, prepped_bf16))
    assert out.shape == (N, out_channels * 4)
    assert jnp.allclose(out, ref, atol=1e-1, rtol=1e-1), "bf16 mismatch vs reference"

    out32 = jax.block_until_ready(bottleneck_forward(x, prepped_f32))
    assert jnp.allclose(out32, ref, atol=3e-4, rtol=3e-4), "f32 mismatch vs reference"

    # --- Case 2: ragged batch over several tiles (cross-tile stats + row masking) ---
    N2 = 40
    x2 = jax.random.normal(kx2, (N2, in_channels), jnp.float32)
    ref2 = reference_forward(x2, params)

    out2 = jax.block_until_ready(bottleneck_forward(x2, prepped_f32, tile_n=16))
    assert out2.shape == (N2, out_channels * 4)
    assert jnp.allclose(out2, ref2, atol=3e-4, rtol=3e-4), "tiled f32 mismatch vs reference"

    out2b = jax.block_until_ready(bottleneck_forward(x2, prepped_bf16, tile_n=16))
    assert jnp.allclose(out2b, ref2, atol=1e-1, rtol=1e-1), "tiled bf16 mismatch vs reference"

    print("KERNEL_OK")
</pallas_src>

<mosaic_0001>
module attributes {stable_mosaic.version = 11 : i64} {
  func.func @_stage1_kernel(%arg0: i32, %arg1: memref<8x128xf32, #tpu.memory_space<vmem>>, %arg2: memref<128x256xbf16, #tpu.memory_space<vmem>>, %arg3: memref<8x128xf32, #tpu.memory_space<vmem>>, %arg4: memref<8x128xf32, #tpu.memory_space<vmem>>, %arg5: memref<2x128xf32, #tpu.memory_space<vmem>>, %arg6: memref<2x128xf32, #tpu.memory_space<vmem>>, %arg7: memref<8x256xf32, #tpu.memory_space<vmem>>, %arg8: memref<8x256xf32, #tpu.memory_space<vmem>>) attributes {dimension_semantics = [#tpu.dimension_semantics<arbitrary>], iteration_bounds = array<i64: 1>, scalar_prefetch = 0 : i64, scratch_operands = 2 : i64, tpu.core_type = #tpu.core_type<tc>, window_params = [{transform_indices = @transform_0, window_bounds = array<i64: 8, 128>}, {pipeline_mode = #tpu.pipeline_mode<synchronous>, transform_indices = @transform_1, window_bounds = array<i64: 128, 256>}, {transform_indices = @transform_2, window_bounds = array<i64: 8, 128>}, {transform_indices = @transform_3, window_bounds = array<i64: 8, 128>}, {pipeline_mode = #tpu.pipeline_mode<synchronous>, transform_indices = @transform_4, window_bounds = array<i64: 2, 128>}, {pipeline_mode = #tpu.pipeline_mode<synchronous>, transform_indices = @transform_5, window_bounds = array<i64: 2, 128>}]} {
    %c0_i32 = arith.constant 0 : i32
    %0 = arith.cmpi eq, %arg0, %c0_i32 : i32
    %1 = arith.extui %0 : i1 to i32
    %c0_i32_0 = arith.constant 0 : i32
    %2 = arith.cmpi ne, %1, %c0_i32_0 : i32
    scf.if %2 {
      %cst_20 = arith.constant 0.000000e+00 : f32
      %24 = vector.broadcast %cst_20 : f32 to vector<8x256xf32>
      %c0_21 = arith.constant 0 : index
      %c0_22 = arith.constant 0 : index
      %25 = vector.load %arg7[%c0_21, %c0_22] : memref<8x256xf32, #tpu.memory_space<vmem>>, vector<8x256xf32>
      tpu.vector_store %arg7[%c0_21, %c0_22], %24 {strides = array<i32>} : memref<8x256xf32, #tpu.memory_space<vmem>>, vector<8x256xf32>,
      %cst_23 = arith.constant 0.000000e+00 : f32
      %26 = vector.broadcast %cst_23 : f32 to vector<8x256xf32>
      %c0_24 = arith.constant 0 : index
      %c0_25 = arith.constant 0 : index
      %27 = vector.load %arg8[%c0_24, %c0_25] : memref<8x256xf32, #tpu.memory_space<vmem>>, vector<8x256xf32>
      tpu.vector_store %arg8[%c0_24, %c0_25], %26 {strides = array<i32>} : memref<8x256xf32, #tpu.memory_space<vmem>>, vector<8x256xf32>,
    } else {
    }
    %c0 = arith.constant 0 : index
    %c0_1 = arith.constant 0 : index
    %3 = vector.load %arg1[%c0, %c0_1] : memref<8x128xf32, #tpu.memory_space<vmem>>, vector<8x128xf32>
    %4 = arith.truncf %3 : vector<8x128xf32> to vector<8x128xbf16>
    %c0_2 = arith.constant 0 : index
    %c0_3 = arith.constant 0 : index
    %5 = vector.load %arg2[%c0_2, %c0_3] : memref<128x256xbf16, #tpu.memory_space<vmem>>, vector<128x256xbf16>
    %cst = arith.constant dense<0.000000e+00> : vector<8x256xf32>
    %6 = tpu.matmul %4, %5, %cst {dimension_numbers = #tpu.dot_dimension_numbers<[1], [0], [0], [1], [0, 0, 1, 1], [], []>} : vector<8x128xbf16>, vector<128x256xbf16>, vector<8x256xf32> -> vector<8x256xf32>
    %7 = vector.extract_strided_slice %6 {offsets = [0, 0], sizes = [8, 128], strides = [1, 1]} : vector<8x256xf32> to vector<8x128xf32>
    %c0_4 = arith.constant 0 : index
    %c0_5 = arith.constant 0 : index
    %8 = vector.load %arg3[%c0_4, %c0_5] : memref<8x128xf32, #tpu.memory_space<vmem>>, vector<8x128xf32>
    tpu.vector_store %arg3[%c0_4, %c0_5], %7 {strides = array<i32>} : memref<8x128xf32, #tpu.memory_space<vmem>>, vector<8x128xf32>,
    %9 = vector.extract_strided_slice %6 {offsets = [0, 128], sizes = [8, 128], strides = [1, 1]} : vector<8x256xf32> to vector<8x128xf32>
    %c0_6 = arith.constant 0 : index
    %c0_7 = arith.constant 0 : index
    %10 = vector.load %arg4[%c0_6, %c0_7] : memref<8x128xf32, #tpu.memory_space<vmem>>, vector<8x128xf32>
    tpu.vector_store %arg4[%c0_6, %c0_7], %9 {strides = array<i32>} : memref<8x128xf32, #tpu.memory_space<vmem>>, vector<8x128xf32>,
    %11 = vector.shape_cast %6 : vector<8x256xf32> to vector<1x8x256xf32>
    %c0_8 = arith.constant 0 : index
    %c0_9 = arith.constant 0 : index
    %12 = vector.load %arg7[%c0_8, %c0_9] : memref<8x256xf32, #tpu.memory_space<vmem>>, vector<8x256xf32>
    %cst_10 = arith.constant dense<0.000000e+00> : vector<8x256xf32>
    %13 = vector.multi_reduction <add>, %11, %cst_10 [0] : vector<1x8x256xf32> to vector<8x256xf32>
    %14 = arith.addf %12, %13 : vector<8x256xf32>
    %c0_11 = arith.constant 0 : index
    %c0_12 = arith.constant 0 : index
    %15 = vector.load %arg7[%c0_11, %c0_12] : memref<8x256xf32, #tpu.memory_space<vmem>>, vector<8x256xf32>
    tpu.vector_store %arg7[%c0_11, %c0_12], %14 {strides = array<i32>} : memref<8x256xf32, #tpu.memory_space<vmem>>, vector<8x256xf32>,
    %c0_13 = arith.constant 0 : index
    %c0_14 = arith.constant 0 : index
    %16 = vector.load %arg8[%c0_13, %c0_14] : memref<8x256xf32, #tpu.memory_space<vmem>>, vector<8x256xf32>
    %17 = arith.mulf %11, %11 : vector<1x8x256xf32>
    %cst_15 = arith.constant dense<0.000000e+00> : vector<8x256xf32>
    %18 = vector.multi_reduction <add>, %17, %cst_15 [0] : vector<1x8x256xf32> to vector<8x256xf32>
    %19 = arith.addf %16, %18 : vector<8x256xf32>
    %c0_16 = arith.constant 0 : index
    %c0_17 = arith.constant 0 : index
    %20 = vector.load %arg8[%c0_16, %c0_17] : memref<8x256xf32, #tpu.memory_space<vmem>>, vector<8x256xf32>
    tpu.vector_store %arg8[%c0_16, %c0_17], %19 {strides = array<i32>} : memref<8x256xf32, #tpu.memory_space<vmem>>, vector<8x256xf32>,
    %c0_i32_18 = arith.constant 0 : i32
    %21 = arith.cmpi eq, %arg0, %c0_i32_18 : i32
    %22 = arith.extui %21 : i1 to i32
    %c0_i32_19 = arith.constant 0 : i32
    %23 = arith.cmpi ne, %22, %c0_i32_19 : i32
    scf.if %23 {
      %c0_20 = arith.constant 0 : index
      %c0_21 = arith.constant 0 : index
      %24 = vector.load %arg7[%c0_20, %c0_21] : memref<8x256xf32, #tpu.memory_space<vmem>>, vector<8x256xf32>
      %c0_22 = arith.constant 0 : index
      %c0_23 = arith.constant 0 : index
      %25 = vector.load %arg8[%c0_22, %c0_23] : memref<8x256xf32, #tpu.memory_space<vmem>>, vector<8x256xf32>
      %26 = vector.extract_strided_slice %24 {offsets = [0, 0], sizes = [8, 128], strides = [1, 1]} : vector<8x256xf32> to vector<8x128xf32>
      %cst_24 = arith.constant dense<0.000000e+00> : vector<128xf32>
      %27 = vector.multi_reduction <add>, %26, %cst_24 [0] : vector<8x128xf32> to vector<128xf32>
      %28 = vector.shape_cast %27 : vector<128xf32> to vector<1x128xf32>
      %29 = vector.extract_strided_slice %25 {offsets = [0, 0], sizes = [8, 128], strides = [1, 1]} : vector<8x256xf32> to vector<8x128xf32>
      %cst_25 = arith.constant dense<0.000000e+00> : vector<128xf32>
      %30 = vector.multi_reduction <add>, %29, %cst_25 [0] : vector<8x128xf32> to vector<128xf32>
      %31 = vector.shape_cast %30 : vector<128xf32> to vector<1x128xf32>
      %32 = tpu.concatenate %28, %31 in 0 : vector<1x128xf32>, vector<1x128xf32> -> vector<2x128xf32>
      %c0_26 = arith.constant 0 : index
      %c0_27 = arith.constant 0 : index
      %33 = vector.load %arg5[%c0_26, %c0_27] : memref<2x128xf32, #tpu.memory_space<vmem>>, vector<2x128xf32>
      tpu.vector_store %arg5[%c0_26, %c0_27], %32 {strides = array<i32>} : memref<2x128xf32, #tpu.memory_space<vmem>>, vector<2x128xf32>,
      %34 = vector.extract_strided_slice %24 {offsets = [0, 128], sizes = [8, 128], strides = [1, 1]} : vector<8x256xf32> to vector<8x128xf32>
      %cst_28 = arith.constant dense<0.000000e+00> : vector<128xf32>
      %35 = vector.multi_reduction <add>, %34, %cst_28 [0] : vector<8x128xf32> to vector<128xf32>
      %36 = vector.shape_cast %35 : vector<128xf32> to vector<1x128xf32>
      %37 = vector.extract_strided_slice %25 {offsets = [0, 128], sizes = [8, 128], strides = [1, 1]} : vector<8x256xf32> to vector<8x128xf32>
      %cst_29 = arith.constant dense<0.000000e+00> : vector<128xf32>
      %38 = vector.multi_reduction <add>, %37, %cst_29 [0] : vector<8x128xf32> to vector<128xf32>
      %39 = vector.shape_cast %38 : vector<128xf32> to vector<1x128xf32>
      %40 = tpu.concatenate %36, %39 in 0 : vector<1x128xf32>, vector<1x128xf32> -> vector<2x128xf32>
      %c0_30 = arith.constant 0 : index
      %c0_31 = arith.constant 0 : index
      %41 = vector.load %arg6[%c0_30, %c0_31] : memref<2x128xf32, #tpu.memory_space<vmem>>, vector<2x128xf32>
      tpu.vector_store %arg6[%c0_30, %c0_31], %40 {strides = array<i32>} : memref<2x128xf32, #tpu.memory_space<vmem>>, vector<2x128xf32>,
    } else {
    }
    return
  }
  func.func @transform_0(%arg0: i32) -> (i32, i32) {
    %c0_i32 = arith.constant 0 : i32
    %c0_i32_0 = arith.constant 0 : i32
    return %arg0, %c0_i32 : i32, i32
  }
  func.func @transform_1(%arg0: i32) -> (i32, i32) {
    %c0_i32 = arith.constant 0 : i32
    %c0_i32_0 = arith.constant 0 : i32
    %c0_i32_1 = arith.constant 0 : i32
    return %c0_i32, %c0_i32_0 : i32, i32
  }
  func.func @transform_2(%arg0: i32) -> (i32, i32) {
    %c0_i32 = arith.constant 0 : i32
    %c0_i32_0 = arith.constant 0 : i32
    return %arg0, %c0_i32 : i32, i32
  }
  func.func @transform_3(%arg0: i32) -> (i32, i32) {
    %c0_i32 = arith.constant 0 : i32
    %c0_i32_0 = arith.constant 0 : i32
    return %arg0, %c0_i32 : i32, i32
  }
  func.func @transform_4(%arg0: i32) -> (i32, i32) {
    %c0_i32 = arith.constant 0 : i32
    %c0_i32_0 = arith.constant 0 : i32
    %c0_i32_1 = arith.constant 0 : i32
    return %c0_i32, %c0_i32_0 : i32, i32
  }
  func.func @transform_5(%arg0: i32) -> (i32, i32) {
    %c0_i32 = arith.constant 0 : i32
    %c0_i32_0 = arith.constant 0 : i32
    %c0_i32_1 = arith.constant 0 : i32
    return %c0_i32, %c0_i32_0 : i32, i32
  }
}

</mosaic_0001>

<llo_original>
// kernel: tpu_custom_call.1
$region0: #{tpu_custom_call.1}
  #allocation0 [shape = 'u32[]', space=smem, size = 0x4, offset = 0x4, fixed_abs, tag = 'smem constant byte address 0x4 - core index']
  #allocation1 [shape = 'u32[144,128]{1,0:T(1,128)}', space=vmem, size = 0x12000, scoped, tag = 'internal scratch']
  #allocation2 [shape = 'f32[8,256]{1,0:T(8,128)}', space=vmem, size = 0x2000, scoped, tag = 'scratch operand']
  #allocation3 [shape = 'f32[8,256]{1,0:T(8,128)}', space=vmem, size = 0x2000, scoped, tag = 'scratch operand']
  %s0 = inlined_call_operand.hbm [shape: f32[8,128], index: 0, kind: input, shape index: {}]
  %s1 = inlined_call_operand.hbm [shape: bf16[128,256], index: 1, kind: input, shape index: {}]
  %s2 = inlined_call_operand.hbm [shape: f32[8,128], index: 2, kind: output, shape index: {0}]
  %s3 = inlined_call_operand.hbm [shape: f32[8,128], index: 3, kind: output, shape index: {1}]
  %s4 = inlined_call_operand.hbm [shape: f32[2,128], index: 4, kind: output, shape index: {2}]
  %s5 = inlined_call_operand.hbm [shape: f32[2,128], index: 5, kind: output, shape index: {3}]
  %6 = xla_tuple %s2, %s3, %s4, %s5
  %s7 = sld [smem:[#allocation0]]
  $region58: #{tpu_custom_call.1} parent=0
    _
  %s9 = ssub.s32 1, %s7
  %s10 = scalar_select 0, %s9, %s7
  $region1: #{tpu_custom_call.1} parent=0
    #allocation4 [shape = 'u8[4096]{0}', space=vmem, size = 0x1000, scoped, tag = 'input window, operand 0, single buffered']
    #allocation5 [shape = 's32[1]{0}', space=sflag, size = 0x4, scoped, tag = 'scoped memory for tpu_custom_call.1']
    #allocation6 [shape = 's32[1]{0}', space=sflag, size = 0x4, scoped, tag = 'scoped memory for tpu_custom_call.1']
    #allocation7 [shape = 'u8[65536]{0}', space=vmem, size = 0x10000, scoped, tag = 'input window, operand 1, single buffered']
    #allocation8 [shape = 's32[1]{0}', space=sflag, size = 0x4, scoped, tag = 'scoped memory for tpu_custom_call.1']
    #allocation9 [shape = 'u8[4096]{0}', space=vmem, size = 0x1000, scoped, tag = 'output window, operand 0, single buffered']
    #allocation10 [shape = 'u8[4096]{0}', space=vmem, size = 0x1000, scoped, tag = 'output window, operand 1, single buffered']
    #allocation11 [shape = 's32[1]{0}', space=sflag, size = 0x4, scoped, tag = 'scoped memory for tpu_custom_call.1']
    #allocation12 [shape = 'u8[1024]{0}', space=vmem, size = 0x400, scoped, tag = 'output window, operand 2, single buffered']
    #allocation13 [shape = 'u8[1024]{0}', space=vmem, size = 0x400, scoped, tag = 'output window, operand 3, single buffered']
    #allocation14 [shape = 's32[1]{0}', space=sflag, size = 0x4, scoped, tag = 'scoped memory for tpu_custom_call.1']
    %11 = vsyncpa [#allocation5], 0
    %12 = vsyncpa [#allocation8], 0
    %13 = vsyncpa [#allocation6], 0
    %14 = vsyncpa [#allocation11], 0
    %15 = vsyncpa [#allocation14], 0
    // Predicated region
    $region2: #{tpu_custom_call.1} parent=1 // pred_check
      _
    $region3: #{tpu_custom_call.1} parent=1 // pred_check_branch
      %17 = sbr.rel (0) target = $region5
    $region4: #{tpu_custom_call.1} parent=1 // pred_region
      %s19 = ssub.s32 128, 128
      %20 = vsyncadd [#allocation5], %s19
      %s22 = sshll.u32 [#allocation4], 4
      %s23 = int_to_ptr.vmem [resolvable:$true] %s22
      %25 = dma.hbm_to_vmem [thread:$0]  %s0, 128, %s23, [#allocation5]
    $region5: #{tpu_custom_call.1} parent=1 // pred_fallthru
      _
    // Predicated region
    $region6: #{tpu_custom_call.1} parent=1 // pred_check
      _
    $region7: #{tpu_custom_call.1} parent=1 // pred_check_branch
      %27 = sbr.rel (0) target = $region9
    $region8: #{tpu_custom_call.1} parent=1 // pred_region
      %s29 = ssub.s32 2048, 2048
      %30 = vsyncadd [#allocation8], %s29
      %s31 = sshll.u32 [#allocation7], 4
      %s32 = int_to_ptr.vmem [resolvable:$true] %s31
      %37 = dma.hbm_to_vmem [thread:$0]  %s1, 2048, %s32, [#allocation8], 128, 128, 8
    $region9: #{tpu_custom_call.1} parent=1 // pred_fallthru
      _
    // Predicated region
    $region10: #{tpu_custom_call.1} parent=1 // pred_check
      _
    $region11: #{tpu_custom_call.1} parent=1 // pred_check_branch
      %39 = sbr.rel (0) target = $region13
    $region12: #{tpu_custom_call.1} parent=1 // pred_region
      %40 = dma.done [#allocation5], 128
    $region13: #{tpu_custom_call.1} parent=1 // pred_fallthru
      _
    // Predicated region
    $region14: #{tpu_custom_call.1} parent=1 // pred_check
      _
    $region15: #{tpu_custom_call.1} parent=1 // pred_check_branch
      %42 = sbr.rel (0) target = $region17
    $region16: #{tpu_custom_call.1} parent=1 // pred_region
      %43 = dma.done [#allocation8], 2048
    $region17: #{tpu_custom_call.1} parent=1 // pred_fallthru
      _
    %p45 = scmp.eq.s32.totalorder 0, 0
    // Predicated region
    $region18: #{tpu_custom_call.1} parent=1 // pred_check
      %p46 = pneg %p45
    $region19: #{tpu_custom_call.1} parent=1 // pred_check_branch
      %48 = sbr.rel (%p46) target = $region21
    $region20: #{tpu_custom_call.1} parent=1 // pred_region
      %49 = vst [vmem:[#allocation2] sm:$0xff] 0.0
      %50 = vst [vmem:[#allocation2 + $0x8] sm:$0xff] 0.0
      %51 = vst [vmem:[#allocation3] sm:$0xff] 0.0
      %52 = vst [vmem:[#allocation3 + $0x8] sm:$0xff] 0.0
    $region21: #{tpu_custom_call.1} parent=1 // pred_fallthru
      _
    %v53 = vld [vmem:[#allocation4] sm:$0xff]
    %v54 = vpack.c.bf16 %v53, %v53
    %v55 = vld [vmem:[#allocation7] sm:$0xff]
    %v56 = vld [vmem:[#allocation7 + $0x8] sm:$0xff]
    %v57 = vld [vmem:[#allocation7 + $0x10] sm:$0xff]
    %v58 = vld [vmem:[#allocation7 + $0x18] sm:$0xff]
    %v59 = vld [vmem:[#allocation7 + $0x20] sm:$0xff]
    %v60 = vld [vmem:[#allocation7 + $0x28] sm:$0xff]
    %v61 = vld [vmem:[#allocation7 + $0x30] sm:$0xff]
    %v62 = vld [vmem:[#allocation7 + $0x38] sm:$0xff]
    %v63 = vld [vmem:[#allocation7 + $0x40] sm:$0xff]
    %v64 = vld [vmem:[#allocation7 + $0x48] sm:$0xff]
    %v65 = vld [vmem:[#allocation7 + $0x50] sm:$0xff]
    %v66 = vld [vmem:[#allocation7 + $0x58] sm:$0xff]
    %v67 = vld [vmem:[#allocation7 + $0x60] sm:$0xff]
    %v68 = vld [vmem:[#allocation7 + $0x68] sm:$0xff]
    %v69 = vld [vmem:[#allocation7 + $0x70] sm:$0xff]
    %v70 = vld [vmem:[#allocation7 + $0x78] sm:$0xff]
    %v87 = vunpack.c.l.b16 %v55
    %v88 = vunpack.c.h.b16 %v55
    %v89 = vunpack.c.l.b16 %v56
    %v90 = vunpack.c.h.b16 %v56
    %v91 = vunpack.c.l.b16 %v57
    %v92 = vunpack.c.h.b16 %v57
    %v93 = vunpack.c.l.b16 %v58
    %v94 = vunpack.c.h.b16 %v58
    %v95 = vunpack.c.l.b16 %v59
    %v96 = vunpack.c.h.b16 %v59
    %v97 = vunpack.c.l.b16 %v60
    %v98 = vunpack.c.h.b16 %v60
    %v99 = vunpack.c.l.b16 %v61
    %v100 = vunpack.c.h.b16 %v61
    %v101 = vunpack.c.l.b16 %v62
    %v102 = vunpack.c.h.b16 %v62
    %v103 = vunpack.c.l.b16 %v63
    %v104 = vunpack.c.h.b16 %v63
    %v105 = vunpack.c.l.b16 %v64
    %v106 = vunpack.c.h.b16 %v64
    %v107 = vunpack.c.l.b16 %v65
    %v108 = vunpack.c.h.b16 %v65
    %v109 = vunpack.c.l.b16 %v66
    %v110 = vunpack.c.h.b16 %v66
    %v111 = vunpack.c.l.b16 %v67
    %v112 = vunpack.c.h.b16 %v67
    %v113 = vunpack.c.l.b16 %v68
    %v114 = vunpack.c.h.b16 %v68
    %v115 = vunpack.c.l.b16 %v69
    %v116 = vunpack.c.h.b16 %v69
    %v117 = vunpack.c.l.b16 %v70
    %v118 = vunpack.c.h.b16 %v70
    %v119 = vpack.c.b16 %v89, %v87
    %v120 = vpack.c.b16 %v90, %v88
    %v121 = vpack.c.b16 %v93, %v91
    %v122 = vpack.c.b16 %v94, %v92
    %v123 = vpack.c.b16 %v97, %v95
    %v124 = vpack.c.b16 %v98, %v96
    %v125 = vpack.c.b16 %v101, %v99
    %v126 = vpack.c.b16 %v102, %v100
    %v127 = vpack.c.b16 %v105, %v103
    %v128 = vpack.c.b16 %v106, %v104
    %v129 = vpack.c.b16 %v109, %v107
    %v130 = vpack.c.b16 %v110, %v108
    %v131 = vpack.c.b16 %v113, %v111
    %v132 = vpack.c.b16 %v114, %v112
    %v133 = vpack.c.b16 %v117, %v115
    %v134 = vpack.c.b16 %v118, %v116
    %151 = vmatprep.subr.bf16.mxu0 %v134
    %152 = vmatpush1.bf16.msra.mxu0 %v133
    %153 = vmatprep.subr.bf16.mxu0 %v132
    %154 = vmatpush1.bf16.msra.mxu0 %v131
    %155 = vmatprep.subr.bf16.mxu0 %v130
    %156 = vmatpush1.bf16.msra.mxu0 %v129
    %157 = vmatprep.subr.bf16.mxu0 %v128
    %158 = vmatpush1.bf16.msra.mxu0 %v127
    %159 = vmatprep.subr.bf16.mxu0 %v126
    %160 = vmatpush1.bf16.msra.mxu0 %v125
    %161 = vmatprep.subr.bf16.mxu0 %v124
    %162 = vmatpush1.bf16.msra.mxu0 %v123
    %163 = vmatprep.subr.bf16.mxu0 %v122
    %164 = vmatpush1.bf16.msra.mxu0 %v121
    %165 = vmatprep.subr.bf16.mxu0 %v120
    %166 = vmatpush1.bf16.msra.mxu0 %v119
    %167 = vmatprep.subr.bf16.mxu0 0
    %168 = vmatpush2.bf16.msra.mxu0 0
    %169 = vmatprep.subr.bf16.mxu0 0
    %170 = vmatpush2.bf16.msra.mxu0 0
    %171 = vmatprep.subr.bf16.mxu0 0
    %172 = vmatpush2.bf16.msra.mxu0 0
    %173 = vmatprep.subr.bf16.mxu0 0
    %174 = vmatpush2.bf16.msra.mxu0 0
    %175 = vmatprep.subr.bf16.mxu0 0
    %176 = vmatpush2.bf16.msra.mxu0 0
    %177 = vmatprep.subr.bf16.mxu0 0
    %178 = vmatpush2.bf16.msra.mxu0 0
    %179 = vmatprep.subr.bf16.mxu0 0
    %180 = vmatpush2.bf16.msra.mxu0 0
    %181 = vmatprep.subr.bf16.mxu0 0
    %182 = vmatpush2.bf16.msra.mxu0 0
    %183 = vmatprep.mubr.bf16.mxu0 0
    %184 = vmatmul.mubr.bf16.gmra.mxu0 %v54
    %v185 = vpop.f32.mrf.mxu0
    %v186 = vadd.f32 0.0, %v185
    %v187 = vpop.f32.mrf.mxu0
    %v188 = vadd.f32 0.0, %v187
    %v189 = vpop.f32.mrf.mxu0
    %v190 = vpop.f32.mrf.mxu0
    %191 = vdwg.mxu0
    %192 = vst [vmem:[#allocation9] sm:$0xff] %v186
    %193 = vst [vmem:[#allocation10] sm:$0xff] %v188
    %v194 = vld [vmem:[#allocation2] sm:$0xff]
    %v195 = vld [vmem:[#allocation2 + $0x8] sm:$0xff]
    %v196 = vadd.f32 %v186, 0.0
    %v197 = vadd.f32 %v188, 0.0
    %v198 = vadd.f32 %v194, %v196
    %v199 = vadd.f32 %v195, %v197
    %200 = vst [vmem:[#allocation2] sm:$0xff] %v198
    %201 = vst [vmem:[#allocation2 + $0x8] sm:$0xff] %v199
    %v202 = vld [vmem:[#allocation3] sm:$0xff]
    %v203 = vld [vmem:[#allocation3 + $0x8] sm:$0xff]
    %v204 = vmul.f32 %v186, %v186
    %v205 = vmul.f32 %v188, %v188
    %v206 = vadd.f32 %v204, 0.0
    %v207 = vadd.f32 %v205, 0.0
    %v208 = vadd.f32 %v202, %v206
    %v209 = vadd.f32 %v203, %v207
    %210 = vst [vmem:[#allocation3] sm:$0xff] %v208
    %211 = vst [vmem:[#allocation3 + $0x8] sm:$0xff] %v209
    // Predicated region
    $region22: #{tpu_custom_call.1} parent=1 // pred_check
      %p212 = pneg %p45
    $region23: #{tpu_custom_call.1} parent=1 // pred_check_branch
      %214 = sbr.rel (%p212) target = $region25
    $region24: #{tpu_custom_call.1} parent=1 // pred_region
      %v215 = vld [vmem:[#allocation2] sm:$0xff]
      %v216 = vld [vmem:[#allocation2 + $0x8] sm:$0xff]
      %v217 = vld [vmem:[#allocation3] sm:$0xff]
      %v218 = vld [vmem:[#allocation3 + $0x8] sm:$0xff]
      %v219 = vrot.slane %v215, 4
      %v220 = vadd.f32 %v215, %v219
      %v221 = vrot.slane %v220, 2
      %v222 = vadd.f32 %v220, %v221
      %v223 = vrot.slane %v222, 1
      %v224 = vadd.f32 %v222, %v223
      %v225 = vrot.slane %v217, 4
      %v226 = vadd.f32 %v217, %v225
      %v227 = vrot.slane %v226, 2
      %v228 = vadd.f32 %v226, %v227
      %v229 = vrot.slane %v228, 1
      %v230 = vadd.f32 %v228, %v229
      %vm231 = vcmask 1040384
      %v232 = vsel %vm231, %v224, %v230
      %233 = vst [vmem:[#allocation12] sm:$0x3] %v232
      %v234 = vrot.slane %v216, 4
      %v235 = vadd.f32 %v216, %v234
      %v236 = vrot.slane %v235, 2
      %v237 = vadd.f32 %v235, %v236
      %v238 = vrot.slane %v237, 1
      %v239 = vadd.f32 %v237, %v238
      %v240 = vrot.slane %v218, 4
      %v241 = vadd.f32 %v218, %v240
      %v242 = vrot.slane %v241, 2
      %v243 = vadd.f32 %v241, %v242
      %v244 = vrot.slane %v243, 1
      %v245 = vadd.f32 %v243, %v244
      %v246 = vsel %vm231, %v239, %v245
      %247 = vst [vmem:[#allocation13] sm:$0x3] %v246
    $region25: #{tpu_custom_call.1} parent=1 // pred_fallthru
      _
    // Predicated region
    $region26: #{tpu_custom_call.1} parent=1 // pred_check
      _
    $region27: #{tpu_custom_call.1} parent=1 // pred_check_branch
      %249 = sbr.rel (0) target = $region29
    $region28: #{tpu_custom_call.1} parent=1 // pred_region
      %s251 = ssub.s32 128, 128
      %252 = vsyncadd [#allocation6], %s251
      %s254 = sshll.u32 [#allocation9], 4
      %s255 = int_to_ptr.vmem [resolvable:$true] %s254
      %257 = dma.vmem_to_hbm [thread:$0]  %s255, 128, %s2, [#allocation6]
    $region29: #{tpu_custom_call.1} parent=1 // pred_fallthru
      _
    // Predicated region
    $region30: #{tpu_custom_call.1} parent=1 // pred_check
      _
    $region31: #{tpu_custom_call.1} parent=1 // pred_check_branch
      %259 = sbr.rel (0) target = $region33
    $region32: #{tpu_custom_call.1} parent=1 // pred_region
      %s261 = ssub.s32 128, 128
      %262 = vsyncadd [#allocation11], %s261
      %s264 = sshll.u32 [#allocation10], 4
      %s265 = int_to_ptr.vmem [resolvable:$true] %s264
      %267 = dma.vmem_to_hbm [thread:$0]  %s265, 128, %s3, [#allocation11]
    $region33: #{tpu_custom_call.1} parent=1 // pred_fallthru
      _
    // Predicated region
    $region34: #{tpu_custom_call.1} parent=1 // pred_check
      _
    $region35: #{tpu_custom_call.1} parent=1 // pred_check_branch
      %269 = sbr.rel (0) target = $region37
    $region36: #{tpu_custom_call.1} parent=1 // pred_region
      %s271 = ssub.s32 32, 32
      %272 = vsyncadd [#allocation11], %s271
      %s274 = sshll.u32 [#allocation12], 4
      %s275 = int_to_ptr.vmem [resolvable:$true] %s274
      %277 = dma.vmem_to_hbm [thread:$0]  %s275, 32, %s4, [#allocation11]
    $region37: #{tpu_custom_call.1} parent=1 // pred_fallthru
      _
    // Predicated region
    $region38: #{tpu_custom_call.1} parent=1 // pred_check
      _
    $region39: #{tpu_custom_call.1} parent=1 // pred_check_branch
      %279 = sbr.rel (0) target = $region41
    $region40: #{tpu_custom_call.1} parent=1 // pred_region
      %s281 = ssub.s32 32, 32
      %282 = vsyncadd [#allocation14], %s281
      %s284 = sshll.u32 [#allocation13], 4
      %s285 = int_to_ptr.vmem [resolvable:$true] %s284
      %287 = dma.vmem_to_hbm [thread:$0]  %s285, 32, %s5, [#allocation14]
    $region41: #{tpu_custom_call.1} parent=1 // pred_fallthru
      _
    // Predicated region
    $region42: #{tpu_custom_call.1} parent=1 // pred_check
      _
    $region43: #{tpu_custom_call.1} parent=1 // pred_check_branch
      %289 = sbr.rel (0) target = $region45
    $region44: #{tpu_custom_call.1} parent=1 // pred_region
      %290 = dma.done [#allocation6], 128
    $region45: #{tpu_custom_call.1} parent=1 // pred_fallthru
      _
    // Predicated region
    $region46: #{tpu_custom_call.1} parent=1 // pred_check
      _
    $region47: #{tpu_custom_call.1} parent=1 // pred_check_branch
      %292 = sbr.rel (0) target = $region49
    $region48: #{tpu_custom_call.1} parent=1 // pred_region
      %293 = dma.done [#allocation11], 128
    $region49: #{tpu_custom_call.1} parent=1 // pred_fallthru
      _
    // Predicated region
    $region50: #{tpu_custom_call.1} parent=1 // pred_check
      _
    $region51: #{tpu_custom_call.1} parent=1 // pred_check_branch
      %295 = sbr.rel (0) target = $region53
    $region52: #{tpu_custom_call.1} parent=1 // pred_region
      %296 = dma.done [#allocation11], 32
    $region53: #{tpu_custom_call.1} parent=1 // pred_fallthru
      _
    // Predicated region
    $region54: #{tpu_custom_call.1} parent=1 // pred_check
      _
    $region55: #{tpu_custom_call.1} parent=1 // pred_check_branch
      %298 = sbr.rel (0) target = $region57
    $region56: #{tpu_custom_call.1} parent=1 // pred_region
      %299 = dma.done [#allocation14], 32
    $region57: #{tpu_custom_call.1} parent=1 // pred_fallthru
      _
    %300 = vsyncpa [#allocation5], 1
    %301 = vsyncpa [#allocation8], 1
    %302 = vsyncpa [#allocation6], 1
    %303 = vsyncpa [#allocation11], 1
    %304 = vsyncpa [#allocation14], 1

</llo_original>
